<compile_context>
chip_gen: v5e
topology: v5e:2x2
jax: 0.10.0
libtpu: 0.0.40
codegen_flags: <defaults>
</compile_context>

<pallas_src>
import functools

import jax
import jax.numpy as jnp
from jax.experimental import pallas as pl
from jax.experimental.pallas import tpu as pltpu


# ----------------------------------------------------------------------------
# Shared LSTM-cell math on VMEM-resident values.
# ----------------------------------------------------------------------------
def _gate_act(gates, g_scale, g_mask):
    """One tanh over the whole gates vreg.

    sigmoid(x) = 0.5*tanh(0.5*x) + 0.5, so: pre-scale non-g lanes by 0.5
    (g_scale = 1 on g lanes, 0.5 elsewhere), single tanh, then affine-correct
    the non-g lanes.  Replaces tanh + sigmoid (exp + reciprocal) EUP passes.
    """
    t = jnp.tanh(gates * g_scale)
    return jnp.where(g_mask, t, 0.5 * t + 0.5)


def _cell(xw_t, h_prev, c_prev, w_hh, b_gates, g_scale, g_mask):
    """One LSTM step given the precomputed input projection xw_t = x_t @ W_x."""
    H = h_prev.shape[-1]
    gates = (xw_t
             + jnp.dot(h_prev.astype(w_hh.dtype), w_hh,
                       preferred_element_type=jnp.float32)
             + b_gates)
    act = _gate_act(gates, g_scale, g_mask)
    i_g = act[:, 0 * H:1 * H]
    f_g = act[:, 1 * H:2 * H]
    g_g = act[:, 2 * H:3 * H]
    o_g = act[:, 3 * H:4 * H]
    c_new = f_g * c_prev + i_g * g_g
    h_new = o_g * jnp.tanh(c_new)
    return h_new, c_new


def _log_softmax_dim0(out):
    """LogSoftmax over dim=0 (batch axis), matching nn.LogSoftmax(dim=0)."""
    m = jnp.max(out, axis=0, keepdims=True)
    z = out - m
    lse = jnp.log(jnp.sum(jnp.exp(z), axis=0, keepdims=True))
    return z - lse


# ----------------------------------------------------------------------------
# Single-step kernel (grid-less; matches the module's forward()).
# Outputs are packed into one (B, A + 2H) buffer -> one writeback DMA.
# ----------------------------------------------------------------------------
def policy_rnn_step_kernel(x_ref, h0_ref, c0_ref, wx_ref, whh_ref, bg_ref,
                           wo_ref, bo_ref, out_ref):
    B, H = h0_ref.shape
    mxu_dtype = wx_ref.dtype

    lane = jax.lax.broadcasted_iota(jnp.int32, (B, 4 * H), 1)
    g_mask = (lane >= 2 * H) & (lane < 3 * H)
    g_scale = jnp.where(g_mask, 1.0, 0.5).astype(jnp.float32)

    xw = jnp.dot(x_ref[...].astype(mxu_dtype), wx_ref[...],
                 preferred_element_type=jnp.float32)
    h_new, c_new = _cell(xw, h0_ref[...], c0_ref[...], whh_ref[...],
                         bg_ref[...], g_scale, g_mask)
    out = jnp.dot(h_new.astype(mxu_dtype), wo_ref[...],
                  preferred_element_type=jnp.float32) + bo_ref[...]
    logits = _log_softmax_dim0(out)

    out_ref[...] = jnp.concatenate([logits, h_new, c_new], axis=1)


def policy_rnn(x, fused, lstm_hidden=None):
    B = x.shape[0]
    H = fused["W_hh"].shape[0]
    A = fused["W_out"].shape[1]

    if lstm_hidden is None:
        h0 = jnp.zeros((B, H), jnp.float32)
        c0 = jnp.zeros((B, H), jnp.float32)
    else:
        h0, c0 = lstm_hidden

    vmem = lambda: pl.BlockSpec(memory_space=pltpu.MemorySpace.VMEM)

    packed = pl.pallas_call(
        policy_rnn_step_kernel,
        out_shape=jax.ShapeDtypeStruct((B, A + 2 * H), jnp.float32),
        in_specs=[vmem() for _ in range(8)],
        out_specs=vmem(),
    )(x, h0, c0, fused["W_x"], fused["W_hh"], fused["b_gates"],
      fused["W_out"], fused["b_out"])

    logits = packed[:, :A]
    h = packed[:, A:A + H]
    c = packed[:, A + H:]
    return logits, (h, c)


# ----------------------------------------------------------------------------
# Rollout kernel: T recurrent steps inside ONE grid-less pallas_call.
#   * preamble: one big MXU matmul for all timesteps' input projections
#   * lax.fori_loop over time with (h, c) as loop-carried values
#   * xs, weights, logits slab all VMEM-resident; final h/c stored once
# ----------------------------------------------------------------------------
def policy_rnn_rollout_kernel(xs_ref, h0_ref, c0_ref, wx_ref, whh_ref, bg_ref,
                              wo_ref, bo_ref,
                              logits_ref, h_ref, c_ref,
                              xw_s, *, T, B):
    H = h0_ref.shape[-1]
    mxu_dtype = wx_ref.dtype

    # Input projection for ALL timesteps in one matmul: (T*B, n_in) @ (n_in, 4H).
    xw_s[...] = jnp.dot(xs_ref[...].astype(mxu_dtype), wx_ref[...],
                        preferred_element_type=jnp.float32)

    # Loop-invariant lane mask / scale (hoisted: iota + broadcast happen once).
    lane = jax.lax.broadcasted_iota(jnp.int32, (B, 4 * H), 1)
    g_mask = (lane >= 2 * H) & (lane < 3 * H)
    g_scale = jnp.where(g_mask, 1.0, 0.5).astype(jnp.float32)

    # VMEM-resident loop constants.
    w_hh = whh_ref[...]
    b_gates = bg_ref[...]
    w_out = wo_ref[...]
    b_out = bo_ref[...]

    def body(t, carry):
        h_prev, c_prev = carry
        row = pl.multiple_of(t * B, B)
        xw_t = xw_s[pl.ds(row, B), :]
        h_new, c_new = _cell(xw_t, h_prev, c_prev, w_hh, b_gates,
                             g_scale, g_mask)
        out = jnp.dot(h_new.astype(mxu_dtype), w_out,
                      preferred_element_type=jnp.float32) + b_out
        logits_ref[t] = _log_softmax_dim0(out)
        return h_new, c_new

    h_final, c_final = jax.lax.fori_loop(0, T, body,
                                         (h0_ref[...], c0_ref[...]))
    h_ref[...] = h_final
    c_ref[...] = c_final


def policy_rnn_rollout(xs, fused, lstm_hidden=None):
    T, B, n_in = xs.shape
    H = fused["W_hh"].shape[0]
    A = fused["W_out"].shape[1]

    if lstm_hidden is None:
        h0 = jnp.zeros((B, H), jnp.float32)
        c0 = jnp.zeros((B, H), jnp.float32)
    else:
        h0, c0 = lstm_hidden

    xs_flat = xs.reshape(T * B, n_in)   # lane-dim unchanged; free relayout
    kernel = functools.partial(policy_rnn_rollout_kernel, T=T, B=B)
    vmem = lambda: pl.BlockSpec(memory_space=pltpu.MemorySpace.VMEM)

    # TODO(synk): for very long T, chunk the resident xs/logits slabs (emit_pipeline)
    # instead of holding all of them in VMEM; trivial at these sizes.
    logits_seq, h, c = pl.pallas_call(
        kernel,
        out_shape=(jax.ShapeDtypeStruct((T, B, A), jnp.float32),
                   jax.ShapeDtypeStruct((B, H), jnp.float32),
                   jax.ShapeDtypeStruct((B, H), jnp.float32)),
        in_specs=[vmem() for _ in range(8)],
        out_specs=(vmem(), vmem(), vmem()),
        scratch_shapes=[pltpu.VMEM((T * B, 4 * H), jnp.float32)],
    )(xs_flat, h0, c0, fused["W_x"], fused["W_hh"], fused["b_gates"],
      fused["W_out"], fused["b_out"])
    return logits_seq, (h, c)


# ----------------------------------------------------------------------------
# Parameters (PyTorch-style init, stored transposed) and host-side fusion.
# ----------------------------------------------------------------------------
def init_params(key, n_inputs, hidden_size, n_actions):
    """Deterministic PyTorch-style uniform init (synthetic, not a checkpoint)."""
    ks = jax.random.split(key, 8)

    def unif(k, shape, bound):
        return jax.random.uniform(k, shape, jnp.float32, -bound, bound)

    b_emb = 1.0 / jnp.sqrt(n_inputs)
    b_lstm = 1.0 / jnp.sqrt(hidden_size)
    b_out = 1.0 / jnp.sqrt(hidden_size)

    return {
        # stored as (in, out) == PyTorch weight.T
        "W_emb": unif(ks[0], (n_inputs, hidden_size), b_emb),
        "b_emb": unif(ks[1], (1, hidden_size), b_emb),
        "W_ih":  unif(ks[2], (hidden_size, 4 * hidden_size), b_lstm),
        "b_ih":  unif(ks[3], (1, 4 * hidden_size), b_lstm),
        "W_hh":  unif(ks[4], (hidden_size, 4 * hidden_size), b_lstm),
        "b_hh":  unif(ks[5], (1, 4 * hidden_size), b_lstm),
        "W_out": unif(ks[6], (hidden_size, n_actions), b_out),
        "b_out": unif(ks[7], (1, n_actions), b_out),
    }


def fuse_params(params, mxu_dtype=jnp.float32):
    """Fold emb Linear into the LSTM input projection; pre-sum the gate biases.

    Matmul weights are stored in `mxu_dtype` once here (bf16 optional for
    v6e/v7x); biases stay f32 and are added to the f32 MXU accumulators.
    Keep mxu_dtype=f32 on v5e and for long rollouts.
    """
    return {
        "W_x": (params["W_emb"] @ params["W_ih"]).astype(mxu_dtype),    # (n_in, 4H)
        "W_hh": params["W_hh"].astype(mxu_dtype),                       # (H, 4H)
        "b_gates": (params["b_emb"] @ params["W_ih"]
                    + params["b_ih"] + params["b_hh"]),                 # (1, 4H)
        "W_out": params["W_out"].astype(mxu_dtype),                     # (H, A)
        "b_out": params["b_out"],                                       # (1, A)
    }


# ----------------------------------------------------------------------------
# Pure-JAX reference (unfused, mirrors the PyTorch module exactly).
# ----------------------------------------------------------------------------
def policy_rnn_ref(x, params, lstm_hidden=None):
    B = x.shape[0]
    H = params["W_hh"].shape[0]
    emb = x @ params["W_emb"] + params["b_emb"]
    if lstm_hidden is None:
        h0 = jnp.zeros((B, H), jnp.float32)
        c0 = jnp.zeros((B, H), jnp.float32)
    else:
        h0, c0 = lstm_hidden
    gates = (emb @ params["W_ih"] + params["b_ih"]
             + h0 @ params["W_hh"] + params["b_hh"])
    i_g = jax.nn.sigmoid(gates[:, 0 * H:1 * H])
    f_g = jax.nn.sigmoid(gates[:, 1 * H:2 * H])
    g_g = jnp.tanh(gates[:, 2 * H:3 * H])
    o_g = jax.nn.sigmoid(gates[:, 3 * H:4 * H])
    c = f_g * c0 + i_g * g_g
    h = o_g * jnp.tanh(c)
    out = h @ params["W_out"] + params["b_out"]
    logits = jax.nn.log_softmax(out, axis=0)   # dim=0 as in the PyTorch module
    return logits, (h, c)


if __name__ == "__main__":
    n_inputs, hidden_size, n_actions, batch, T = 16, 32, 8, 8, 6

    key = jax.random.PRNGKey(0)
    k_param, k_x, k_xs, k_h, k_c = jax.random.split(key, 5)
    params = init_params(k_param, n_inputs, hidden_size, n_actions)
    fused = fuse_params(params)                                  # f32 (default)
    fused_bf16 = fuse_params(params, mxu_dtype=jnp.bfloat16)     # opt-in bf16
    x = jax.random.normal(k_x, (batch, n_inputs), jnp.float32)

    # --- single step, f32, lstm_hidden=None path ---
    logits, (h, c) = policy_rnn(x, fused)
    jax.block_until_ready((logits, h, c))
    ref_logits, (ref_h, ref_c) = policy_rnn_ref(x, params)
    assert jnp.allclose(logits, ref_logits, atol=1e-4, rtol=1e-4)
    assert jnp.allclose(h, ref_h, atol=1e-4, rtol=1e-4)
    assert jnp.allclose(c, ref_c, atol=1e-4, rtol=1e-4)

    # --- single step, explicit hidden state, bf16 weights (v6e/v7x option) ---
    h0 = 0.5 * jax.random.normal(k_h, (batch, hidden_size), jnp.float32)
    c0 = 0.5 * jax.random.normal(k_c, (batch, hidden_size), jnp.float32)
    logits_bf, (h_bf, c_bf) = policy_rnn(x, fused_bf16, (h0, c0))
    jax.block_until_ready((logits_bf, h_bf, c_bf))
    ref_logits2, (ref_h2, ref_c2) = policy_rnn_ref(x, params, (h0, c0))
    assert jnp.allclose(logits_bf, ref_logits2, atol=1e-1, rtol=1e-1)
    assert jnp.allclose(h_bf, ref_h2, atol=1e-1, rtol=1e-1)
    assert jnp.allclose(c_bf, ref_c2, atol=1e-1, rtol=1e-1)

    # --- T-step rollout: one pallas_call, in-kernel fori_loop over time ---
    xs = jax.random.normal(k_xs, (T, batch, n_inputs), jnp.float32)
    logits_seq, (h_T, c_T) = policy_rnn_rollout(xs, fused)
    jax.block_until_ready((logits_seq, h_T, c_T))

    state = None
    ref_seq = []
    for t in range(T):
        lg, state = policy_rnn_ref(xs[t], params, state)
        ref_seq.append(lg)
    ref_seq = jnp.stack(ref_seq)
    assert jnp.allclose(logits_seq, ref_seq, atol=5e-4, rtol=5e-4)
    assert jnp.allclose(h_T, state[0], atol=5e-4, rtol=5e-4)
    assert jnp.allclose(c_T, state[1], atol=5e-4, rtol=5e-4)

    print("KERNEL_OK")
</pallas_src>

<mosaic_0001>
module attributes {stable_mosaic.version = 11 : i64} {
  func.func @policy_rnn_step_kernel(%arg0: memref<8x16xf32, #tpu.memory_space<vmem>>, %arg1: memref<8x32xf32, #tpu.memory_space<vmem>>, %arg2: memref<8x32xf32, #tpu.memory_space<vmem>>, %arg3: memref<16x128xf32, #tpu.memory_space<vmem>>, %arg4: memref<32x128xf32, #tpu.memory_space<vmem>>, %arg5: memref<1x128xf32, #tpu.memory_space<vmem>>, %arg6: memref<32x8xf32, #tpu.memory_space<vmem>>, %arg7: memref<1x8xf32, #tpu.memory_space<vmem>>, %arg8: memref<8x72xf32, #tpu.memory_space<vmem>>) attributes {dimension_semantics = [], scalar_prefetch = 0 : i64, scratch_operands = 0 : i64, tpu.core_type = #tpu.core_type<tc>} {
    %0 = tpu.iota {dimensions = array<i32: 1>} : vector<8x128xi32>
    %c64_i32 = arith.constant 64 : i32
    %1 = vector.broadcast %c64_i32 : i32 to vector<8x128xi32>
    %2 = arith.cmpi sge, %0, %1 : vector<8x128xi32>
    %c96_i32 = arith.constant 96 : i32
    %3 = vector.broadcast %c96_i32 : i32 to vector<8x128xi32>
    %4 = arith.cmpi slt, %0, %3 : vector<8x128xi32>
    %5 = arith.andi %2, %4 : vector<8x128xi1>
    %cst = arith.constant 1.000000e+00 : f32
    %cst_0 = arith.constant 5.000000e-01 : f32
    %6 = vector.broadcast %cst : f32 to vector<8x128xf32>
    %7 = vector.broadcast %cst_0 : f32 to vector<8x128xf32>
    %8 = arith.select %5, %6, %7 : vector<8x128xi1>, vector<8x128xf32>
    %c0 = arith.constant 0 : index
    %c0_1 = arith.constant 0 : index
    %9 = vector.load %arg0[%c0, %c0_1] : memref<8x16xf32, #tpu.memory_space<vmem>>, vector<8x16xf32>
    %c0_2 = arith.constant 0 : index
    %c0_3 = arith.constant 0 : index
    %10 = vector.load %arg3[%c0_2, %c0_3] : memref<16x128xf32, #tpu.memory_space<vmem>>, vector<16x128xf32>
    %cst_4 = arith.constant dense<0.000000e+00> : vector<8x128xf32>
    %11 = tpu.matmul %9, %10, %cst_4 {dimension_numbers = #tpu.dot_dimension_numbers<[1], [0], [0], [1], [0, 0, 1, 1], [], []>} : vector<8x16xf32>, vector<16x128xf32>, vector<8x128xf32> -> vector<8x128xf32>
    %c0_5 = arith.constant 0 : index
    %c0_6 = arith.constant 0 : index
    %12 = vector.load %arg1[%c0_5, %c0_6] : memref<8x32xf32, #tpu.memory_space<vmem>>, vector<8x32xf32>
    %c0_7 = arith.constant 0 : index
    %c0_8 = arith.constant 0 : index
    %13 = vector.load %arg2[%c0_7, %c0_8] : memref<8x32xf32, #tpu.memory_space<vmem>>, vector<8x32xf32>
    %c0_9 = arith.constant 0 : index
    %c0_10 = arith.constant 0 : index
    %14 = vector.load %arg4[%c0_9, %c0_10] : memref<32x128xf32, #tpu.memory_space<vmem>>, vector<32x128xf32>
    %c0_11 = arith.constant 0 : index
    %c0_12 = arith.constant 0 : index
    %15 = vector.load %arg5[%c0_11, %c0_12] : memref<1x128xf32, #tpu.memory_space<vmem>>, vector<1x128xf32>
    %cst_13 = arith.constant dense<0.000000e+00> : vector<8x128xf32>
    %16 = tpu.matmul %12, %14, %cst_13 {dimension_numbers = #tpu.dot_dimension_numbers<[1], [0], [0], [1], [0, 0, 1, 1], [], []>} : vector<8x32xf32>, vector<32x128xf32>, vector<8x128xf32> -> vector<8x128xf32>
    %17 = arith.addf %11, %16 : vector<8x128xf32>
    %18 = vector.broadcast %15 : vector<1x128xf32> to vector<8x128xf32>
    %19 = arith.addf %17, %18 : vector<8x128xf32>
    %20 = arith.mulf %19, %8 : vector<8x128xf32>
    %21 = math.tanh %20 : vector<8x128xf32>
    %cst_14 = arith.constant 5.000000e-01 : f32
    %22 = vector.broadcast %cst_14 : f32 to vector<8x128xf32>
    %23 = arith.mulf %22, %21 : vector<8x128xf32>
    %cst_15 = arith.constant 5.000000e-01 : f32
    %24 = vector.broadcast %cst_15 : f32 to vector<8x128xf32>
    %25 = arith.addf %23, %24 : vector<8x128xf32>
    %26 = arith.select %5, %21, %25 : vector<8x128xi1>, vector<8x128xf32>
    %27 = vector.extract_strided_slice %26 {offsets = [0, 0], sizes = [8, 32], strides = [1, 1]} : vector<8x128xf32> to vector<8x32xf32>
    %28 = vector.extract_strided_slice %26 {offsets = [0, 32], sizes = [8, 32], strides = [1, 1]} : vector<8x128xf32> to vector<8x32xf32>
    %29 = vector.extract_strided_slice %26 {offsets = [0, 64], sizes = [8, 32], strides = [1, 1]} : vector<8x128xf32> to vector<8x32xf32>
    %30 = vector.extract_strided_slice %26 {offsets = [0, 96], sizes = [8, 32], strides = [1, 1]} : vector<8x128xf32> to vector<8x32xf32>
    %31 = arith.mulf %28, %13 : vector<8x32xf32>
    %32 = arith.mulf %27, %29 : vector<8x32xf32>
    %33 = arith.addf %31, %32 : vector<8x32xf32>
    %34 = math.tanh %33 : vector<8x32xf32>
    %35 = arith.mulf %30, %34 : vector<8x32xf32>
    %c0_16 = arith.constant 0 : index
    %c0_17 = arith.constant 0 : index
    %36 = vector.load %arg6[%c0_16, %c0_17] : memref<32x8xf32, #tpu.memory_space<vmem>>, vector<32x8xf32>
    %cst_18 = arith.constant dense<0.000000e+00> : vector<8x8xf32>
    %37 = tpu.matmul %35, %36, %cst_18 {dimension_numbers = #tpu.dot_dimension_numbers<[1], [0], [0], [1], [0, 0, 1, 1], [], []>} : vector<8x32xf32>, vector<32x8xf32>, vector<8x8xf32> -> vector<8x8xf32>
    %c0_19 = arith.constant 0 : index
    %c0_20 = arith.constant 0 : index
    %38 = vector.load %arg7[%c0_19, %c0_20] : memref<1x8xf32, #tpu.memory_space<vmem>>, vector<1x8xf32>
    %39 = vector.broadcast %38 : vector<1x8xf32> to vector<8x8xf32>
    %40 = arith.addf %37, %39 : vector<8x8xf32>
    %cst_21 = arith.constant dense<0xFF800000> : vector<8xf32>
    %41 = vector.multi_reduction <maximumf>, %40, %cst_21 [0] : vector<8x8xf32> to vector<8xf32>
    %42 = vector.shape_cast %41 : vector<8xf32> to vector<1x8xf32>
    %43 = vector.broadcast %42 : vector<1x8xf32> to vector<8x8xf32>
    %44 = arith.subf %40, %43 : vector<8x8xf32>
    %45 = math.exp %44 : vector<8x8xf32>
    %cst_22 = arith.constant dense<0.000000e+00> : vector<8xf32>
    %46 = vector.multi_reduction <add>, %45, %cst_22 [0] : vector<8x8xf32> to vector<8xf32>
    %47 = vector.shape_cast %46 : vector<8xf32> to vector<1x8xf32>
    %48 = math.log %47 : vector<1x8xf32>
    %49 = vector.broadcast %48 : vector<1x8xf32> to vector<8x8xf32>
    %50 = arith.subf %44, %49 : vector<8x8xf32>
    %51 = tpu.concatenate %50, %35, %33 in 1 : vector<8x8xf32>, vector<8x32xf32>, vector<8x32xf32> -> vector<8x72xf32>
    %c0_23 = arith.constant 0 : index
    %c0_24 = arith.constant 0 : index
    %52 = vector.load %arg8[%c0_23, %c0_24] : memref<8x72xf32, #tpu.memory_space<vmem>>, vector<8x72xf32>
    tpu.vector_store %arg8[%c0_23, %c0_24], %51 {strides = array<i32>} : memref<8x72xf32, #tpu.memory_space<vmem>>, vector<8x72xf32>,
    return
  }
}

</mosaic_0001>

<llo_original>
// kernel: tpu_custom_call.1
$region0: #{tpu_custom_call.1}
  #allocation0 [shape = 'u32[]', space=smem, size = 0x4, offset = 0x4, fixed_abs, tag = 'smem constant byte address 0x4 - core index']
  #allocation1 [shape = 'u32[72,128]{1,0:T(1,128)}', space=vmem, size = 0x9000, scoped, tag = 'internal scratch']
  %s0 = inlined_call_operand.vmem [shape: f32[8,16], index: 0, kind: input, shape index: {}]
  %s1 = inlined_call_operand.hbm [shape: f32[8,32], index: 1, kind: input, shape index: {}]
  %s2 = inlined_call_operand.hbm [shape: f32[8,32], index: 2, kind: input, shape index: {}]
  %s3 = inlined_call_operand.hbm [shape: f32[16,128], index: 3, kind: input, shape index: {}]
  %s4 = inlined_call_operand.vmem [shape: f32[32,128], index: 4, kind: input, shape index: {}]
  %s5 = inlined_call_operand.vmem [shape: f32[1,128], index: 5, kind: input, shape index: {}]
  %s6 = inlined_call_operand.vmem [shape: f32[32,8], index: 6, kind: input, shape index: {}]
  %s7 = inlined_call_operand.vmem [shape: f32[1,8], index: 7, kind: input, shape index: {}]
  %s8 = inlined_call_operand.hbm [shape: f32[8,72], index: 8, kind: output, shape index: {}]
  %s9 = sld [smem:[#allocation0]]
  $region54: #{tpu_custom_call.1} parent=0
    _
  %s11 = ssub.s32 1, %s9
  %s12 = scalar_select 0, %s11, %s9
  $region1: #{tpu_custom_call.1} parent=0
    #allocation2 [shape = 'u8[4096]{0}', space=vmem, size = 0x1000, scoped, tag = 'input window, operand 1, single buffered']
    #allocation3 [shape = 's32[1]{0}', space=sflag, size = 0x4, scoped, tag = 'scoped memory for tpu_custom_call.1']
    #allocation4 [shape = 's32[1]{0}', space=sflag, size = 0x4, scoped, tag = 'scoped memory for tpu_custom_call.1']
    #allocation5 [shape = 'u8[4096]{0}', space=vmem, size = 0x1000, scoped, tag = 'input window, operand 2, single buffered']
    #allocation6 [shape = 's32[1]{0}', space=sflag, size = 0x4, scoped, tag = 'scoped memory for tpu_custom_call.1']
    #allocation7 [shape = 'u8[8192]{0}', space=vmem, size = 0x2000, scoped, tag = 'input window, operand 3, single buffered']
    #allocation8 [shape = 'u8[4096]{0}', space=vmem, size = 0x1000, scoped, tag = 'output window, operand 0, single buffered']
    %13 = vsyncpa [#allocation3], 0
    %14 = vsyncpa [#allocation6], 0
    %15 = vsyncpa [#allocation4], 0
    // Predicated region
    $region2: #{tpu_custom_call.1} parent=1 // pred_check
      _
    $region3: #{tpu_custom_call.1} parent=1 // pred_check_branch
      %17 = sbr.rel (0) target = $region5
    $region4: #{tpu_custom_call.1} parent=1 // pred_region
      _
    $region5: #{tpu_custom_call.1} parent=1 // pred_fallthru
      _
    // Predicated region
    $region6: #{tpu_custom_call.1} parent=1 // pred_check
      _
    $region7: #{tpu_custom_call.1} parent=1 // pred_check_branch
      %19 = sbr.rel (0) target = $region9
    $region8: #{tpu_custom_call.1} parent=1 // pred_region
      %21 = vsyncadd [#allocation3], 0
      %s23 = sshll.u32 %s1, 4
      %s24 = int_to_ptr.hbm [resolvable:$true] %s23
      %s25 = sshll.u32 [#allocation2], 4
      %s26 = int_to_ptr.vmem [resolvable:$true] %s25
      %28 = dma.hbm_to_vmem [thread:$0]  %s24, 128, %s26, [#allocation3]
    $region9: #{tpu_custom_call.1} parent=1 // pred_fallthru
      _
    // Predicated region
    $region10: #{tpu_custom_call.1} parent=1 // pred_check
      _
    $region11: #{tpu_custom_call.1} parent=1 // pred_check_branch
      %30 = sbr.rel (0) target = $region13
    $region12: #{tpu_custom_call.1} parent=1 // pred_region
      %32 = vsyncadd [#allocation6], 0
      %s34 = sshll.u32 %s2, 4
      %s35 = int_to_ptr.hbm [resolvable:$true] %s34
      %s36 = sshll.u32 [#allocation5], 4
      %s37 = int_to_ptr.vmem [resolvable:$true] %s36
      %39 = dma.hbm_to_vmem [thread:$0]  %s35, 128, %s37, [#allocation6]
    $region13: #{tpu_custom_call.1} parent=1 // pred_fallthru
      _
    // Predicated region
    $region14: #{tpu_custom_call.1} parent=1 // pred_check
      _
    $region15: #{tpu_custom_call.1} parent=1 // pred_check_branch
      %41 = sbr.rel (0) target = $region17
    $region16: #{tpu_custom_call.1} parent=1 // pred_region
      %43 = vsyncadd [#allocation6], 0
      %s44 = sshll.u32 %s3, 4
      %s45 = int_to_ptr.hbm [resolvable:$true] %s44
      %s46 = sshll.u32 [#allocation7], 4
      %s47 = int_to_ptr.vmem [resolvable:$true] %s46
      %52 = dma.hbm_to_vmem [thread:$0]  %s45, 256, %s47, [#allocation6], 128, 128, 8
    $region17: #{tpu_custom_call.1} parent=1 // pred_fallthru
      _
    // Predicated region
    $region18: #{tpu_custom_call.1} parent=1 // pred_check
      _
    $region19: #{tpu_custom_call.1} parent=1 // pred_check_branch
      %54 = sbr.rel (0) target = $region21
    $region20: #{tpu_custom_call.1} parent=1 // pred_region
      _
    $region21: #{tpu_custom_call.1} parent=1 // pred_fallthru
      _
    // Predicated region
    $region22: #{tpu_custom_call.1} parent=1 // pred_check
      _
    $region23: #{tpu_custom_call.1} parent=1 // pred_check_branch
      %56 = sbr.rel (0) target = $region25
    $region24: #{tpu_custom_call.1} parent=1 // pred_region
      _
    $region25: #{tpu_custom_call.1} parent=1 // pred_fallthru
      _
    // Predicated region
    $region26: #{tpu_custom_call.1} parent=1 // pred_check
      _
    $region27: #{tpu_custom_call.1} parent=1 // pred_check_branch
      %58 = sbr.rel (0) target = $region29
    $region28: #{tpu_custom_call.1} parent=1 // pred_region
      _
    $region29: #{tpu_custom_call.1} parent=1 // pred_fallthru
      _
    // Predicated region
    $region30: #{tpu_custom_call.1} parent=1 // pred_check
      _
    $region31: #{tpu_custom_call.1} parent=1 // pred_check_branch
      %60 = sbr.rel (0) target = $region33
    $region32: #{tpu_custom_call.1} parent=1 // pred_region
      _
    $region33: #{tpu_custom_call.1} parent=1 // pred_fallthru
      _
    // Predicated region
    $region34: #{tpu_custom_call.1} parent=1 // pred_check
      _
    $region35: #{tpu_custom_call.1} parent=1 // pred_check_branch
      %62 = sbr.rel (0) target = $region37
    $region36: #{tpu_custom_call.1} parent=1 // pred_region
      %64 = dma.done [#allocation3], 128
    $region37: #{tpu_custom_call.1} parent=1 // pred_fallthru
      _
    // Predicated region
    $region38: #{tpu_custom_call.1} parent=1 // pred_check
      _
    $region39: #{tpu_custom_call.1} parent=1 // pred_check_branch
      %66 = sbr.rel (0) target = $region41
    $region40: #{tpu_custom_call.1} parent=1 // pred_region
      %68 = dma.done [#allocation6], 128
    $region41: #{tpu_custom_call.1} parent=1 // pred_fallthru
      _
    // Predicated region
    $region42: #{tpu_custom_call.1} parent=1 // pred_check
      _
    $region43: #{tpu_custom_call.1} parent=1 // pred_check_branch
      %70 = sbr.rel (0) target = $region45
    $region44: #{tpu_custom_call.1} parent=1 // pred_region
      %72 = dma.done [#allocation6], 256
    $region45: #{tpu_custom_call.1} parent=1 // pred_fallthru
      _
    %v73 = vlaneseq
    %v74 = vand.u32 %v73, 127
    %vm75 = vcmp.ge.s32.totalorder %v74, 64
    %vm76 = vcmp.lt.s32.totalorder %v74, 96
    %vm77 = vmand %vm75, %vm76
    %v78 = vsel %vm77, 1.0, 0.5
    %v79 = vld [vmem:[%s0] sm:$0xff]
    %v80 = vld [vmem:[#allocation7] sm:$0xff]
    %v81 = vld [vmem:[#allocation7 + $0x8] sm:$0xff]
    %v82 = vld [vmem:[#allocation2] sm:$0xff]
    %v83 = vld [vmem:[#allocation5] sm:$0xff]
    %v84 = vld [vmem:[%s4] sm:$0xff]
    %v85 = vld [vmem:[%s4 + $0x8] sm:$0xff]
    %v86 = vld [vmem:[%s4 + $0x10] sm:$0xff]
    %v87 = vld [vmem:[%s4 + $0x18] sm:$0xff]
    %v88 = vld [vmem:[%s5] sm:$0x1]
    %vm89 = vcmask 261120
    %v91 = vsel %vm89, %v82, 0
    %93 = vmatpush.msra.mxu0 0.0
    %94 = vmatpush.msra.mxu0 0.0
    %95 = vmatpush.msra.mxu0 0.0
    %96 = vmatpush.msra.mxu0 0.0
    %97 = vmatpush.msra.mxu0 0.0
    %98 = vmatpush.msra.mxu0 0.0
    %99 = vmatpush.msra.mxu0 0.0
    %100 = vmatpush.msra.mxu0 0.0
    %101 = vmatpush.msra.mxu0 0.0
    %102 = vmatpush.msra.mxu0 0.0
    %103 = vmatpush.msra.mxu0 0.0
    %104 = vmatpush.msra.mxu0 0.0
    %105 = vmatpush.msra.mxu0 %v87
    %106 = vmatpush.msra.mxu0 %v86
    %107 = vmatpush.msra.mxu0 %v85
    %108 = vmatpush.msra.mxu0 %v84
    %109 = vmatmul.f32.gmra.mxu0 %v91
    %v110 = vpop.f32.mrf.mxu0
    %v111 = vadd.f32 0.0, %v110
    %112 = vdwg.mxu0
    %vm113 = vcmask 130048
    %v115 = vsel %vm113, %v79, 0
    %117 = vmatpush.msra.mxu0 0.0
    %118 = vmatpush.msra.mxu0 0.0
    %119 = vmatpush.msra.mxu0 0.0
    %120 = vmatpush.msra.mxu0 0.0
    %121 = vmatpush.msra.mxu0 0.0
    %122 = vmatpush.msra.mxu0 0.0
    %123 = vmatpush.msra.mxu0 0.0
    %124 = vmatpush.msra.mxu0 0.0
    %125 = vmatpush.msra.mxu0 0.0
    %126 = vmatpush.msra.mxu0 0.0
    %127 = vmatpush.msra.mxu0 0.0
    %128 = vmatpush.msra.mxu0 0.0
    %129 = vmatpush.msra.mxu0 0.0
    %130 = vmatpush.msra.mxu0 0.0
    %131 = vmatpush.msra.mxu0 %v81
    %132 = vmatpush.msra.mxu0 %v80
    %133 = vmatmul.f32.gmra.mxu0 %v115
    %v134 = vpop.f32.mrf.mxu0
    %v135 = vadd.f32 %v111, %v134
    %136 = vdwg.mxu0
    %v138 = vperm.slane %v88, 0
    %v140 = vadd.f32 %v135, %v138
    %v141 = vmul.f32 %v140, %v78
    %v142 = vtanh.pop %v141
    %v143 = vmul.f32 %v142, 0.5
    %v144 = vadd.f32 %v143, 0.5
    %v145 = vsel %vm77, %v142, %v144
    %147 = vrot.lane.b32.xlu0 %v83, 32
    %v148 = vpop.permute.xlu0 %147
    %v150 = vmul.f32 %v145, %v148
    %152 = vrot.lane.b32.xlu0 %v145, 64
    %v153 = vpop.permute.xlu0 %152
    %v155 = vmul.f32 %v145, %v153
    %157 = vrot.lane.b32.xlu0 %v155, 32
    %v158 = vpop.permute.xlu0 %157
    %v160 = vadd.f32 %v150, %v158
    %v161 = vtanh.pop %v160
    %163 = vrot.lane.b32.xlu0 %v161, 64
    %v164 = vpop.permute.xlu0 %163
    %v166 = vmul.f32 %v145, %v164
    %v167 = vld [vmem:[%s6] sm:$0xff]
    %v168 = vld [vmem:[%s6 + $0x8] sm:$0xff]
    %v169 = vld [vmem:[%s6 + $0x10] sm:$0xff]
    %v170 = vld [vmem:[%s6 + $0x18] sm:$0xff]
    %v171 = vld [vmem:[%s7] sm:$0x1]
    %v173 = vperm.slane %v171, 0
    %176 = vrot.lane.b32.xlu0 %v166, 32
    %v177 = vpop.permute.xlu0 %176
    %v178 = vsel %vm89, %v177, 0
    %180 = vmatpush.msra.mxu0 0.0
    %181 = vmatpush.msra.mxu0 0.0
    %182 = vmatpush.msra.mxu0 0.0
    %183 = vmatpush.msra.mxu0 0.0
    %184 = vmatpush.msra.mxu0 0.0
    %185 = vmatpush.msra.mxu0 0.0
    %186 = vmatpush.msra.mxu0 0.0
    %187 = vmatpush.msra.mxu0 0.0
    %188 = vmatpush.msra.mxu0 0.0
    %189 = vmatpush.msra.mxu0 0.0
    %190 = vmatpush.msra.mxu0 0.0
    %191 = vmatpush.msra.mxu0 0.0
    %192 = vmatpush.msra.mxu0 %v170
    %193 = vmatpush.msra.mxu0 %v169
    %194 = vmatpush.msra.mxu0 %v168
    %195 = vmatpush.msra.mxu0 %v167
    %196 = vmatmul.f32.gmra.mxu0 %v178
    %v197 = vpop.f32.mrf.mxu0
    %v198 = vadd.f32 %v173, %v197
    %199 = vdwg.mxu0
    %vm200 = vcmask 64512
    %v201 = vsel %vm200, %v198, -inf
    %v202 = vrot.slane %v201, 4
    %v203 = vmax.f32 %v201, %v202
    %v204 = vrot.slane %v203, 2
    %v205 = vmax.f32 %v203, %v204
    %v206 = vrot.slane %v205, 1
    %v207 = vmax.f32 %v205, %v206
    %v208 = vsub.f32 %v198, %v207
    %v209 = vmul.f32 %v208, 1.442695
    %v210 = vpow.pop %v209
    %v211 = vsel %vm200, %v210, 0.0
    %v212 = vrot.slane %v211, 4
    %v213 = vadd.f32 %v211, %v212
    %v214 = vrot.slane %v213, 2
    %v215 = vadd.f32 %v213, %v214
    %v216 = vrot.slane %v215, 1
    %v217 = vadd.f32 %v215, %v216
    %v218 = vlog2.pop %v217
    %v219 = vmul.f32 %v218, 0.6931472
    %v220 = vsub.f32 %v208, %v219
    %221 = vrot.lane.b32.xlu0 %v166, 40
    %v222 = vpop.permute.xlu0 %221
    %225 = vrot.lane.b32.xlu0 %v160, 8
    %v226 = vpop.permute.xlu0 %225
    %v228 = vsel %vm200, %v220, %v222
    %vm229 = vcmask 326656
    %v230 = vsel %vm229, %v228, %v226
    %vm231 = vcmask 588800
    %232 = vst.msk [vmem:[#allocation8] sm:$0xff] %vm231, %v230
    // Predicated region
    $region46: #{tpu_custom_call.1} parent=1 // pred_check
      _
    $region47: #{tpu_custom_call.1} parent=1 // pred_check_branch
      %234 = sbr.rel (0) target = $region49
    $region48: #{tpu_custom_call.1} parent=1 // pred_region
      %236 = vsyncadd [#allocation4], 0
      %s238 = sshll.u32 [#allocation8], 4
      %s239 = int_to_ptr.vmem [resolvable:$true] %s238
      %s240 = sshll.u32 %s8, 4
      %s241 = int_to_ptr.hbm [resolvable:$true] %s240
      %243 = dma.vmem_to_hbm [thread:$0]  %s239, 128, %s241, [#allocation4]
    $region49: #{tpu_custom_call.1} parent=1 // pred_fallthru
      _
    // Predicated region
    $region50: #{tpu_custom_call.1} parent=1 // pred_check
      _
    $region51: #{tpu_custom_call.1} parent=1 // pred_check_branch
      %245 = sbr.rel (0) target = $region53
    $region52: #{tpu_custom_call.1} parent=1 // pred_region
      %247 = dma.done [#allocation4], 128
    $region53: #{tpu_custom_call.1} parent=1 // pred_fallthru
      _
    %248 = vsyncpa [#allocation3], 1
    %249 = vsyncpa [#allocation6], 1
    %250 = vsyncpa [#allocation4], 1

</llo_original>
